<compile_context>
chip_gen: v7x
topology: tpu7x:2x2x1
jax: 0.10.0
libtpu: 0.0.40
codegen_flags: <defaults>
</compile_context>

<pallas_src>
import jax
import jax.numpy as jnp
from jax.experimental import pallas as pl
from jax.experimental.pallas import tpu as pltpu


def _round_up(n, m):
    return (n + m - 1) // m * m


def highway_kernel(x_ref, wt_ref, bt_ref, wg_ref, bg_ref, o_ref):
    """grid = (m_tile, layer). o_ref (f32) is the carried activation."""
    layer = pl.program_id(1)

    # Seed the carried state with the input on the first layer of this M tile.
    @pl.when(layer == 0)
    def _():
        o_ref[...] = x_ref[...].astype(jnp.float32)

    x = o_ref[...]                              # (tm, Dp) f32 carried state
    xb = x.astype(jnp.bfloat16)                 # MXU operand (bf16 x bf16 -> f32)

    # transform branch: ReLU(x @ Wt + bt)       (activation documented as ReLU)
    h = jnp.dot(xb, wt_ref[...], preferred_element_type=jnp.float32) + bt_ref[...]
    h = jnp.maximum(h, 0.0)

    # gate branch: sigmoid(x @ Wg + bg)
    g = jax.nn.sigmoid(
        jnp.dot(xb, wg_ref[...], preferred_element_type=jnp.float32) + bg_ref[...]
    )

    # highway mix: h*g + x*(1-g) == x + g*(h - x)
    o_ref[...] = x + g * (h - x)


def highway_forward(x, wt, bt, wg, bg, *, tm=256):
    """Highway network forward.

    x : (M, D)     input activations
    wt: (L, D, D)  transform weights, PyTorch nn.Linear convention (out, in)
    bt: (L, D)     transform biases
    wg: (L, D, D)  gate weights, PyTorch convention
    bg: (L, D)     gate biases
    """
    M, D = x.shape
    L = wt.shape[0]
    out_dtype = x.dtype

    # ---- one-time layout prep (plain XLA) ---------------------------------
    wt_k = jnp.swapaxes(wt, -1, -2).astype(jnp.bfloat16)   # (L, D, D), y = x @ W
    wg_k = jnp.swapaxes(wg, -1, -2).astype(jnp.bfloat16)
    bt_k = bt.reshape(L, 1, D).astype(jnp.float32)
    bg_k = bg.reshape(L, 1, D).astype(jnp.float32)

    # Pad to lane/sublane-dense shapes (last dim -> x128, rows -> x tile).
    Dp = _round_up(D, 128)
    tm = min(tm, _round_up(M, 8))
    Mp = _round_up(M, tm)

    if Dp != D:
        x = jnp.pad(x, ((0, 0), (0, Dp - D)))
        wt_k = jnp.pad(wt_k, ((0, 0), (0, Dp - D), (0, Dp - D)))
        wg_k = jnp.pad(wg_k, ((0, 0), (0, Dp - D), (0, Dp - D)))
        bt_k = jnp.pad(bt_k, ((0, 0), (0, 0), (0, Dp - D)))
        bg_k = jnp.pad(bg_k, ((0, 0), (0, 0), (0, Dp - D)))
    if Mp != M:
        x = jnp.pad(x, ((0, Mp - M), (0, 0)))

    m_tiles = Mp // tm

    # Rough double-buffered VMEM need, clamped to 64 MiB so the same setting
    # stays safe on v7x (64 MiB VMEM per TensorCore).
    vmem_need = (
        2 * (2 * Dp * Dp * 2)      # Wt, Wg: 2 pipeline bufs, bf16
        + 2 * (2 * Dp * 4)         # bt, bg: 2 bufs, f32
        + 2 * tm * Dp * 4          # x tile: 2 bufs, f32
        + 2 * tm * Dp * 4          # out tile (carried state): 2 bufs, f32
        + (4 << 20)                # headroom
    )
    vmem_limit = int(min(max(vmem_need, 32 << 20), 64 << 20))
    # TODO(synk): for very large D (>= ~2048) add an N tile over the weight
    # output dim (grid=(Mt, Nt, L)) instead of relying on vmem_limit alone.

    out = pl.pallas_call(
        highway_kernel,
        out_shape=jax.ShapeDtypeStruct((Mp, Dp), jnp.float32),
        grid=(m_tiles, L),
        in_specs=[
            pl.BlockSpec((tm, Dp), lambda m, l: (m, 0)),           # x (used at l==0)
            pl.BlockSpec((None, Dp, Dp), lambda m, l: (l, 0, 0)),  # Wt (bf16)
            pl.BlockSpec((None, 1, Dp), lambda m, l: (l, 0, 0)),   # bt (f32)
            pl.BlockSpec((None, Dp, Dp), lambda m, l: (l, 0, 0)),  # Wg (bf16)
            pl.BlockSpec((None, 1, Dp), lambda m, l: (l, 0, 0)),   # bg (f32)
        ],
        out_specs=pl.BlockSpec((tm, Dp), lambda m, l: (m, 0)),     # carried f32 state
        compiler_params=pltpu.CompilerParams(
            dimension_semantics=("parallel", "arbitrary"),
            vmem_limit_bytes=vmem_limit,
        ),
    )(x, wt_k, bt_k, wg_k, bg_k)

    return out[:M, :D].astype(out_dtype)


def highway_reference(x, wt, bt, wg, bg):
    """Pure-JAX reference mirroring the PyTorch forward, with matmul operands
    rounded to bf16 exactly like the kernel (f32 accumulate / elementwise)."""
    L = wt.shape[0]
    wt_b = jnp.swapaxes(wt, -1, -2).astype(jnp.bfloat16)
    wg_b = jnp.swapaxes(wg, -1, -2).astype(jnp.bfloat16)
    h_x = x.astype(jnp.float32)
    for layer in range(L):
        xb = h_x.astype(jnp.bfloat16)
        h = jnp.maximum(
            jnp.dot(xb, wt_b[layer], preferred_element_type=jnp.float32) + bt[layer],
            0.0,
        )
        g = jax.nn.sigmoid(
            jnp.dot(xb, wg_b[layer], preferred_element_type=jnp.float32) + bg[layer]
        )
        h_x = h_x + g * (h - h_x)
    return h_x


if __name__ == "__main__":
    key = jax.random.PRNGKey(0)
    M, D, L = 16, 64, 3  # batch=16, dimension=64, n_layers=3

    k_x, k_wt, k_bt, k_wg, k_bg = jax.random.split(key, 5)
    scale = 1.0 / float(jnp.sqrt(D))
    x = jax.random.normal(k_x, (M, D), dtype=jnp.float32)
    wt = jax.random.uniform(k_wt, (L, D, D), jnp.float32, -scale, scale)
    bt = jax.random.uniform(k_bt, (L, D), jnp.float32, -scale, scale)
    wg = jax.random.uniform(k_wg, (L, D, D), jnp.float32, -scale, scale)
    bg = jax.random.uniform(k_bg, (L, D), jnp.float32, -scale, scale)

    out = jax.block_until_ready(highway_forward(x, wt, bt, wg, bg))
    ref = highway_reference(x, wt, bt, wg, bg)

    assert out.shape == (M, D)
    assert jnp.allclose(out, ref, atol=2e-3, rtol=2e-3), float(
        jnp.max(jnp.abs(out - ref))
    )

    print("KERNEL_OK")
</pallas_src>

<mosaic_0001>
module attributes {stable_mosaic.version = 11 : i64} {
  func.func @highway_kernel(%arg0: i32, %arg1: i32, %arg2: memref<16x128xf32, #tpu.memory_space<vmem>>, %arg3: memref<1x128x128xbf16, #tpu.memory_space<vmem>>, %arg4: memref<1x1x128xf32, #tpu.memory_space<vmem>>, %arg5: memref<1x128x128xbf16, #tpu.memory_space<vmem>>, %arg6: memref<1x1x128xf32, #tpu.memory_space<vmem>>, %arg7: memref<16x128xf32, #tpu.memory_space<vmem>>) attributes {dimension_semantics = [#tpu.dimension_semantics<parallel>, #tpu.dimension_semantics<arbitrary>], iteration_bounds = array<i64: 1, 3>, scalar_prefetch = 0 : i64, scratch_operands = 0 : i64, tpu.core_type = #tpu.core_type<tc>, window_params = [{transform_indices = @transform_0, window_bounds = array<i64: 16, 128>}, {transform_indices = @transform_1, window_bounds = array<i64: 1, 128, 128>}, {transform_indices = @transform_2, window_bounds = array<i64: 1, 1, 128>}, {transform_indices = @transform_3, window_bounds = array<i64: 1, 128, 128>}, {transform_indices = @transform_4, window_bounds = array<i64: 1, 1, 128>}, {transform_indices = @transform_5, window_bounds = array<i64: 16, 128>}]} {
    %c0_i32 = arith.constant 0 : i32
    %0 = arith.cmpi eq, %arg1, %c0_i32 : i32
    %1 = arith.extui %0 : i1 to i32
    %c0_i32_0 = arith.constant 0 : i32
    %2 = arith.cmpi ne, %1, %c0_i32_0 : i32
    scf.if %2 {
      %c0_19 = arith.constant 0 : index
      %c0_20 = arith.constant 0 : index
      %30 = vector.load %arg2[%c0_19, %c0_20] : memref<16x128xf32, #tpu.memory_space<vmem>>, vector<16x128xf32>
      %c0_21 = arith.constant 0 : index
      %c0_22 = arith.constant 0 : index
      %31 = vector.load %arg7[%c0_21, %c0_22] : memref<16x128xf32, #tpu.memory_space<vmem>>, vector<16x128xf32>
      tpu.vector_store %arg7[%c0_21, %c0_22], %30 {strides = array<i32>} : memref<16x128xf32, #tpu.memory_space<vmem>>, vector<16x128xf32>,
    } else {
    }
    %c0 = arith.constant 0 : index
    %c0_1 = arith.constant 0 : index
    %3 = vector.load %arg7[%c0, %c0_1] : memref<16x128xf32, #tpu.memory_space<vmem>>, vector<16x128xf32>
    %4 = arith.truncf %3 : vector<16x128xf32> to vector<16x128xbf16>
    %c0_2 = arith.constant 0 : index
    %c0_3 = arith.constant 0 : index
    %c0_4 = arith.constant 0 : index
    %5 = vector.load %arg3[%c0_2, %c0_3, %c0_4] : memref<1x128x128xbf16, #tpu.memory_space<vmem>>, vector<1x128x128xbf16>
    %6 = vector.shape_cast %5 : vector<1x128x128xbf16> to vector<128x128xbf16>
    %cst = arith.constant dense<0.000000e+00> : vector<16x128xf32>
    %7 = tpu.matmul %4, %6, %cst {dimension_numbers = #tpu.dot_dimension_numbers<[1], [0], [0], [1], [0, 0, 1, 1], [], []>} : vector<16x128xbf16>, vector<128x128xbf16>, vector<16x128xf32> -> vector<16x128xf32>
    %c0_5 = arith.constant 0 : index
    %c0_6 = arith.constant 0 : index
    %c0_7 = arith.constant 0 : index
    %8 = vector.load %arg4[%c0_5, %c0_6, %c0_7] : memref<1x1x128xf32, #tpu.memory_space<vmem>>, vector<1x1x128xf32>
    %9 = vector.shape_cast %8 : vector<1x1x128xf32> to vector<1x128xf32>
    %10 = vector.broadcast %9 : vector<1x128xf32> to vector<16x128xf32>
    %11 = arith.addf %7, %10 : vector<16x128xf32>
    %cst_8 = arith.constant 0.000000e+00 : f32
    %12 = vector.broadcast %cst_8 : f32 to vector<16x128xf32>
    %13 = arith.maximumf %11, %12 : vector<16x128xf32>
    %c0_9 = arith.constant 0 : index
    %c0_10 = arith.constant 0 : index
    %c0_11 = arith.constant 0 : index
    %14 = vector.load %arg5[%c0_9, %c0_10, %c0_11] : memref<1x128x128xbf16, #tpu.memory_space<vmem>>, vector<1x128x128xbf16>
    %15 = vector.shape_cast %14 : vector<1x128x128xbf16> to vector<128x128xbf16>
    %cst_12 = arith.constant dense<0.000000e+00> : vector<16x128xf32>
    %16 = tpu.matmul %4, %15, %cst_12 {dimension_numbers = #tpu.dot_dimension_numbers<[1], [0], [0], [1], [0, 0, 1, 1], [], []>} : vector<16x128xbf16>, vector<128x128xbf16>, vector<16x128xf32> -> vector<16x128xf32>
    %c0_13 = arith.constant 0 : index
    %c0_14 = arith.constant 0 : index
    %c0_15 = arith.constant 0 : index
    %17 = vector.load %arg6[%c0_13, %c0_14, %c0_15] : memref<1x1x128xf32, #tpu.memory_space<vmem>>, vector<1x1x128xf32>
    %18 = vector.shape_cast %17 : vector<1x1x128xf32> to vector<1x128xf32>
    %19 = vector.broadcast %18 : vector<1x128xf32> to vector<16x128xf32>
    %20 = arith.addf %16, %19 : vector<16x128xf32>
    %21 = arith.negf %20 : vector<16x128xf32>
    %22 = math.exp %21 : vector<16x128xf32>
    %cst_16 = arith.constant 1.000000e+00 : f32
    %23 = vector.broadcast %cst_16 : f32 to vector<16x128xf32>
    %24 = arith.addf %23, %22 : vector<16x128xf32>
    %25 = arith.divf %23, %24 : vector<16x128xf32>
    %26 = arith.subf %13, %3 : vector<16x128xf32>
    %27 = arith.mulf %25, %26 : vector<16x128xf32>
    %28 = arith.addf %3, %27 : vector<16x128xf32>
    %c0_17 = arith.constant 0 : index
    %c0_18 = arith.constant 0 : index
    %29 = vector.load %arg7[%c0_17, %c0_18] : memref<16x128xf32, #tpu.memory_space<vmem>>, vector<16x128xf32>
    tpu.vector_store %arg7[%c0_17, %c0_18], %28 {strides = array<i32>} : memref<16x128xf32, #tpu.memory_space<vmem>>, vector<16x128xf32>,
    return
  }
  func.func @transform_0(%arg0: i32, %arg1: i32) -> (i32, i32) {
    %c0_i32 = arith.constant 0 : i32
    %c0_i32_0 = arith.constant 0 : i32
    return %arg0, %c0_i32 : i32, i32
  }
  func.func @transform_1(%arg0: i32, %arg1: i32) -> (i32, i32, i32) {
    %c0_i32 = arith.constant 0 : i32
    %c0_i32_0 = arith.constant 0 : i32
    %c0_i32_1 = arith.constant 0 : i32
    return %arg1, %c0_i32, %c0_i32_0 : i32, i32, i32
  }
  func.func @transform_2(%arg0: i32, %arg1: i32) -> (i32, i32, i32) {
    %c0_i32 = arith.constant 0 : i32
    %c0_i32_0 = arith.constant 0 : i32
    %c0_i32_1 = arith.constant 0 : i32
    return %arg1, %c0_i32, %c0_i32_0 : i32, i32, i32
  }
  func.func @transform_3(%arg0: i32, %arg1: i32) -> (i32, i32, i32) {
    %c0_i32 = arith.constant 0 : i32
    %c0_i32_0 = arith.constant 0 : i32
    %c0_i32_1 = arith.constant 0 : i32
    return %arg1, %c0_i32, %c0_i32_0 : i32, i32, i32
  }
  func.func @transform_4(%arg0: i32, %arg1: i32) -> (i32, i32, i32) {
    %c0_i32 = arith.constant 0 : i32
    %c0_i32_0 = arith.constant 0 : i32
    %c0_i32_1 = arith.constant 0 : i32
    return %arg1, %c0_i32, %c0_i32_0 : i32, i32, i32
  }
  func.func @transform_5(%arg0: i32, %arg1: i32) -> (i32, i32) {
    %c0_i32 = arith.constant 0 : i32
    %c0_i32_0 = arith.constant 0 : i32
    return %arg0, %c0_i32 : i32, i32
  }
}

</mosaic_0001>

<llo_original>
// kernel: tpu_custom_call.1
$region0: #{tpu_custom_call.1}
  #allocation0 [shape = 'u32[]', space=smem, size = 0x4, offset = 0x4, fixed_abs, tag = 'smem constant byte address 0x4 - core index']
  #allocation1 [shape = 'u32[144,128]{1,0:T(1,128)}', space=vmem, size = 0x12000, scoped, tag = 'internal scratch']
  %s0 = inlined_call_operand.hbm [shape: f32[16,128], index: 0, kind: input, shape index: {}]
  %s1 = inlined_call_operand.hbm [shape: bf16[3,128,128], index: 1, kind: input, shape index: {}]
  %s2 = inlined_call_operand.vmem [shape: f32[3,1,128], index: 2, kind: input, shape index: {}]
  %s3 = inlined_call_operand.hbm [shape: bf16[3,128,128], index: 3, kind: input, shape index: {}]
  %s4 = inlined_call_operand.vmem [shape: f32[3,1,128], index: 4, kind: input, shape index: {}]
  %s5 = inlined_call_operand.hbm [shape: f32[16,128], index: 5, kind: output, shape index: {}]
  %s6 = sld [smem:[#allocation0]]
  $region69: #{tpu_custom_call.1} parent=0
    _
  %s8 = ssub.s32 1, %s6
  %s9 = scalar_select 0, %s8, %s6
  $region1: #{tpu_custom_call.1} parent=0
    #allocation2 [shape = 'u8[8192]{0}', space=vmem, size = 0x2000, scoped, tag = 'input window, operand 0, single buffered']
    #allocation3 [shape = 's32[2]{0}', space=sflag, size = 0x8, scoped, tag = 'scoped memory for tpu_custom_call.1']
    #allocation4 [shape = 's32[2]{0}', space=sflag, size = 0x8, scoped, tag = 'scoped memory for tpu_custom_call.1']
    #allocation5 [shape = 'u8[65536]{0}', space=vmem, size = 0x10000, scoped, tag = 'input window, operand 1']
    #allocation6 [shape = 's32[2]{0}', space=sflag, size = 0x8, scoped, tag = 'scoped memory for tpu_custom_call.1']
    #allocation7 [shape = 'u8[65536]{0}', space=vmem, size = 0x10000, scoped, tag = 'input window, operand 3']
    #allocation8 [shape = 'u8[8192]{0}', space=vmem, size = 0x2000, scoped, tag = 'output window, operand 0, single buffered']
    %10 = vsyncpa [#allocation3], 0
    %11 = vsyncpa [#allocation6], 0
    %s12 = scalar_lea.sflag [#allocation6], 1
    %13 = vsyncpa %s12, 0
    %14 = vsyncpa [#allocation4], 0
    loop: start=0, step=1, limit=5
    $region2: #{tpu_custom_call.1} parent=1 // loop_pre_header
      _
    $region3: #{tpu_custom_call.1} parent=1 // loop_header
      %s16 = sphi 0, %s20
      %p17 = scmp.ge.s32.totalorder %s16, 5
      %s23 = sphi 0, %s35
      %s24 = sphi 0, %s31
      %s25 = sphi 0, %s23
      %s26 = sphi 0, %s24
      %s27 = sphi 0, %s25
      %s28 = sphi 0, %s26
      %s38 = sphi 0, %s40
      %s41 = sphi 0, %s38
      %s42 = sphi 0, %s41
      %s58 = sphi 0, %s42
      %s64 = sphi 0, %s66
      %s67 = sphi 0, %s64
      %s68 = sphi 0, %s67
      %s84 = sphi 0, %s68
      %s90 = sphi 0, %s92
      %s93 = sphi 0, %s90
      %s94 = sphi 0, %s93
      %s110 = sphi 0, %s94
      %s116 = sphi 0, %s118
      %s119 = sphi 0, %s116
      %s120 = sphi 0, %s119
      %s136 = sphi 0, %s120
      %s142 = sphi 0, %s144
      %s145 = sphi 0, %s142
      %s146 = sphi 0, %s145
      %s162 = sphi 0, %s146
      %s168 = sphi 0, %s170
      %s171 = sphi 0, %s168
      %s172 = sphi 0, %s171
      %s188 = sphi 0, %s172
    $region4: #{tpu_custom_call.1} parent=1 // loop_header_branch
      %19 = sbr.rel (%p17) target = $region8
    $region5: #{tpu_custom_call.1} parent=1 // loop_body
      %s21 = ssub.s32 %s16, 1
      %s22 = ssub.s32 %s16, 2
      %s29 = sadd.s32 1, %s24
      %p30 = scmp.ge.s32.totalorder %s29, 3
      %s31 = scalar_select %p30, 0, %s29
      %s32 = sadd.s32 1, %s23
      %s33 = scalar_select %p30, %s32, %s23
      %p34 = scmp.ge.s32.totalorder %s33, 1
      %s35 = scalar_select %p34, 0, %s33
      %s36 = ssub.s32 %s23, %s35
      %p37 = scmp.eq.s32.totalorder %s36, 0
      %s39 = sadd.s32 %s38, 1
      %s40 = scalar_select %p37, %s38, %s39
      %p43 = pneg %p37
      %p44 = scmp.eq.s32.totalorder %s16, 2
      %p45 = por %p43, %p44
      %p46 = scmp.ne.s32.totalorder %s38, %s41
      %p47 = scmp.eq.s32.totalorder %s16, 0
      %p48 = por %p46, %p47
      %p49 = scmp.ne.s32.totalorder %s38, %s41
      %p50 = scmp.eq.s32.totalorder %s21, 2
      %p51 = por %p49, %p50
      %p52 = scmp.ne.s32.totalorder %s41, %s42
      %p53 = scmp.eq.s32.totalorder %s21, 0
      %p54 = por %p52, %p53
      %p55 = scmp.ne.s32.totalorder %s41, %s42
      %p56 = scmp.eq.s32.totalorder %s22, 2
      %p57 = por %p55, %p56
      %p59 = scmp.ne.s32.totalorder %s42, %s58
      %p60 = scmp.eq.s32.totalorder %s22, 0
      %p61 = por %p59, %p60
      %s62 = ssub.s32 %s24, %s31
      %p63 = scmp.eq.s32.totalorder %s62, 0
      %s65 = sadd.s32 %s64, 1
      %s66 = scalar_select %p63, %s64, %s65
      %p69 = pneg %p63
      %p70 = scmp.eq.s32.totalorder %s16, 2
      %p71 = por %p69, %p70
      %p72 = scmp.ne.s32.totalorder %s64, %s67
      %p73 = scmp.eq.s32.totalorder %s16, 0
      %p74 = por %p72, %p73
      %p75 = scmp.ne.s32.totalorder %s64, %s67
      %p76 = scmp.eq.s32.totalorder %s21, 2
      %p77 = por %p75, %p76
      %p78 = scmp.ne.s32.totalorder %s67, %s68
      %p79 = scmp.eq.s32.totalorder %s21, 0
      %p80 = por %p78, %p79
      %p81 = scmp.ne.s32.totalorder %s67, %s68
      %p82 = scmp.eq.s32.totalorder %s22, 2
      %p83 = por %p81, %p82
      %p85 = scmp.ne.s32.totalorder %s68, %s84
      %p86 = scmp.eq.s32.totalorder %s22, 0
      %p87 = por %p85, %p86
      %s88 = ssub.s32 %s24, %s31
      %p89 = scmp.eq.s32.totalorder %s88, 0
      %s91 = sadd.s32 %s90, 1
      %s92 = scalar_select %p89, %s90, %s91
      %p95 = pneg %p89
      %p96 = scmp.eq.s32.totalorder %s16, 2
      %p97 = por %p95, %p96
      %p98 = scmp.ne.s32.totalorder %s90, %s93
      %p99 = scmp.eq.s32.totalorder %s16, 0
      %p100 = por %p98, %p99
      %p101 = scmp.ne.s32.totalorder %s90, %s93
      %p102 = scmp.eq.s32.totalorder %s21, 2
      %p103 = por %p101, %p102
      %p104 = scmp.ne.s32.totalorder %s93, %s94
      %p105 = scmp.eq.s32.totalorder %s21, 0
      %p106 = por %p104, %p105
      %p107 = scmp.ne.s32.totalorder %s93, %s94
      %p108 = scmp.eq.s32.totalorder %s22, 2
      %p109 = por %p107, %p108
      %p111 = scmp.ne.s32.totalorder %s94, %s110
      %p112 = scmp.eq.s32.totalorder %s22, 0
      %p113 = por %p111, %p112
      %s114 = ssub.s32 %s24, %s31
      %p115 = scmp.eq.s32.totalorder %s114, 0
      %s117 = sadd.s32 %s116, 1
      %s118 = scalar_select %p115, %s116, %s117
      %p121 = pneg %p115
      %p122 = scmp.eq.s32.totalorder %s16, 2
      %p123 = por %p121, %p122
      %p124 = scmp.ne.s32.totalorder %s116, %s119
      %p125 = scmp.eq.s32.totalorder %s16, 0
      %p126 = por %p124, %p125
      %p127 = scmp.ne.s32.totalorder %s116, %s119
      %p128 = scmp.eq.s32.totalorder %s21, 2
      %p129 = por %p127, %p128
      %p130 = scmp.ne.s32.totalorder %s119, %s120
      %p131 = scmp.eq.s32.totalorder %s21, 0
      %p132 = por %p130, %p131
      %p133 = scmp.ne.s32.totalorder %s119, %s120
      %p134 = scmp.eq.s32.totalorder %s22, 2
      %p135 = por %p133, %p134
      %p137 = scmp.ne.s32.totalorder %s120, %s136
      %p138 = scmp.eq.s32.totalorder %s22, 0
      %p139 = por %p137, %p138
      %s140 = ssub.s32 %s24, %s31
      %p141 = scmp.eq.s32.totalorder %s140, 0
      %s143 = sadd.s32 %s142, 1
      %s144 = scalar_select %p141, %s142, %s143
      %p147 = pneg %p141
      %p148 = scmp.eq.s32.totalorder %s16, 2
      %p149 = por %p147, %p148
      %p150 = scmp.ne.s32.totalorder %s142, %s145
      %p151 = scmp.eq.s32.totalorder %s16, 0
      %p152 = por %p150, %p151
      %p153 = scmp.ne.s32.totalorder %s142, %s145
      %p154 = scmp.eq.s32.totalorder %s21, 2
      %p155 = por %p153, %p154
      %p156 = scmp.ne.s32.totalorder %s145, %s146
      %p157 = scmp.eq.s32.totalorder %s21, 0
      %p158 = por %p156, %p157
      %p159 = scmp.ne.s32.totalorder %s145, %s146
      %p160 = scmp.eq.s32.totalorder %s22, 2
      %p161 = por %p159, %p160
      %p163 = scmp.ne.s32.totalorder %s146, %s162
      %p164 = scmp.eq.s32.totalorder %s22, 0
      %p165 = por %p163, %p164
      %s166 = ssub.s32 %s23, %s35
      %p167 = scmp.eq.s32.totalorder %s166, 0
      %s169 = sadd.s32 %s168, 1
      %s170 = scalar_select %p167, %s168, %s169
      %p173 = pneg %p167
      %p174 = scmp.eq.s32.totalorder %s16, 2
      %p175 = por %p173, %p174
      %p176 = scmp.ne.s32.totalorder %s168, %s171
      %p177 = scmp.eq.s32.totalorder %s16, 0
      %p178 = por %p176, %p177
      %p179 = scmp.ne.s32.totalorder %s168, %s171
      %p180 = scmp.eq.s32.totalorder %s21, 2
      %p181 = por %p179, %p180
      %p182 = scmp.ne.s32.totalorder %s171, %s172
      %p183 = scmp.eq.s32.totalorder %s21, 0
      %p184 = por %p182, %p183
      %p185 = scmp.ne.s32.totalorder %s171, %s172
      %p186 = scmp.eq.s32.totalorder %s22, 2
      %p187 = por %p185, %p186
      %p189 = scmp.ne.s32.totalorder %s172, %s188
      %p190 = scmp.eq.s32.totalorder %s22, 0
      %p191 = por %p189, %p190
      %p192 = scmp.le.s32.totalorder 1, %s16
      %p193 = scmp.lt.s32.totalorder %s16, 4
      %p194 = pnand %p192, %p193
      %p195 = pneg %p194
      // Predicated region
      $region9: #{tpu_custom_call.1} parent=5 // pred_check
        _
      $region10: #{tpu_custom_call.1} parent=5 // pred_check_branch
        %197 = sbr.rel (%p194) target = $region12
      $region11: #{tpu_custom_call.1} parent=5 // pred_region
        %s198 = ssub.s32 %s16, 1
        // Predicated region
        $region13: #{tpu_custom_call.1} parent=11 // pred_check
          %p199 = pneg %p54
        $region14: #{tpu_custom_call.1} parent=11 // pred_check_branch
          %201 = sbr.rel (%p199) target = $region16
        $region15: #{tpu_custom_call.1} parent=11 // pred_region
          %s202 = smul.u32 2, %s25
          %s204 = ssub.s32 256, 256
          %205 = vsyncadd [#allocation3], %s204
          %s206 = smul.addr %s202, 128
          %s207 = scalar_lea.hbm %s0, %s206
          %s208 = sshll.u32 [#allocation2], 4
          %s209 = int_to_ptr.vmem [resolvable:$true] %s208
          %214 = dma.hbm_to_vmem [thread:$0]  %s207, 256, %s209, [#allocation3], 128, 128, 8
        $region16: #{tpu_custom_call.1} parent=11 // pred_fallthru
          _
      $region12: #{tpu_custom_call.1} parent=5 // pred_fallthru
        _
      %p215 = scmp.lt.s32.totalorder %s16, 3
      // Predicated region
      $region17: #{tpu_custom_call.1} parent=5 // pred_check
        %p216 = pneg %p215
      $region18: #{tpu_custom_call.1} parent=5 // pred_check_branch
        %218 = sbr.rel (%p216) target = $region20
      $region19: #{tpu_custom_call.1} parent=5 // pred_region
        // Predicated region
        $region21: #{tpu_custom_call.1} parent=19 // pred_check
          %p219 = pneg %p74
        $region22: #{tpu_custom_call.1} parent=19 // pred_check_branch
          %221 = sbr.rel (%p219) target = $region24
        $region23: #{tpu_custom_call.1} parent=19 // pred_region
          %s222 = sand.u32 %s16, 1
          %s223 = scalar_lea.sflag [#allocation6], %s222
          %s224 = sand.u32 %s64, 1
          %s225 = smul.addr %s224, 64
          %s226 = scalar_lea.vmem [#allocation5], %s225
          %s228 = ssub.s32 1024, 1024
          %229 = vsyncadd %s223, %s228
          %s230 = smul.addr %s24, 16
          %s231 = smul.addr %s230, 64
          %s232 = scalar_lea.hbm %s1, %s231
          %s233 = sshll.u32 %s226, 4
          %s234 = int_to_ptr.vmem [resolvable:$true] %s233
          %239 = dma.hbm_to_vmem [thread:$0]  %s232, 1024, %s234, %s223, 64, 64, 4
        $region24: #{tpu_custom_call.1} parent=19 // pred_fallthru
          _
        // Predicated region
        $region25: #{tpu_custom_call.1} parent=19 // pred_check
          %p240 = pneg %p100
        $region26: #{tpu_custom_call.1} parent=19 // pred_check_branch
          %242 = sbr.rel (%p240) target = $region28
        $region27: #{tpu_custom_call.1} parent=19 // pred_region
          %p243 = scmp.lt.s32.totalorder %s24, 2
          %s244 = scalar_select %p243, %s24, 2
          %s245 = scalar_lea.vmem %s2, %s244
        $region28: #{tpu_custom_call.1} parent=19 // pred_fallthru
          _
        // Predicated region
        $region29: #{tpu_custom_call.1} parent=19 // pred_check
          %p246 = pneg %p126
        $region30: #{tpu_custom_call.1} parent=19 // pred_check_branch
          %248 = sbr.rel (%p246) target = $region32
        $region31: #{tpu_custom_call.1} parent=19 // pred_region
          %s249 = sand.u32 %s16, 1
          %s250 = scalar_lea.sflag [#allocation6], %s249
          %s251 = sand.u32 %s116, 1
          %s252 = smul.addr %s251, 64
          %s253 = scalar_lea.vmem [#allocation7], %s252
          %s255 = ssub.s32 1024, 1024
          %256 = vsyncadd %s250, %s255
          %s257 = smul.addr %s24, 16
          %s258 = smul.addr %s257, 64
          %s259 = scalar_lea.hbm %s3, %s258
          %s260 = sshll.u32 %s253, 4
          %s261 = int_to_ptr.vmem [resolvable:$true] %s260
          %266 = dma.hbm_to_vmem [thread:$0]  %s259, 1024, %s261, %s250, 64, 64, 4
        $region32: #{tpu_custom_call.1} parent=19 // pred_fallthru
          _
        // Predicated region
        $region33: #{tpu_custom_call.1} parent=19 // pred_check
          %p267 = pneg %p152
        $region34: #{tpu_custom_call.1} parent=19 // pred_check_branch
          %269 = sbr.rel (%p267) target = $region36
        $region35: #{tpu_custom_call.1} parent=19 // pred_region
          %p270 = scmp.lt.s32.totalorder %s24, 2
          %s271 = scalar_select %p270, %s24, 2
          %s272 = scalar_lea.vmem %s4, %s271
        $region36: #{tpu_custom_call.1} parent=19 // pred_fallthru
          _
      $region20: #{tpu_custom_call.1} parent=5 // pred_fallthru
        _
      %p273 = scmp.le.s32.totalorder 1, %s16
      %p274 = scmp.lt.s32.totalorder %s16, 4
      %p275 = pnand %p273, %p274
      %p276 = pneg %p275
      // Predicated region
      $region37: #{tpu_custom_call.1} parent=5 // pred_check
        _
      $region38: #{tpu_custom_call.1} parent=5 // pred_check_branch
        %278 = sbr.rel (%p275) target = $region40
      $region39: #{tpu_custom_call.1} parent=5 // pred_region
        %s279 = ssub.s32 %s16, 1
        // Predicated region
        $region41: #{tpu_custom_call.1} parent=39 // pred_check
          %p280 = pneg %p54
        $region42: #{tpu_custom_call.1} parent=39 // pred_check_branch
          %282 = sbr.rel (%p280) target = $region44
        $region43: #{tpu_custom_call.1} parent=39 // pred_region
          %283 = dma.done [#allocation3], 256
        $region44: #{tpu_custom_call.1} parent=39 // pred_fallthru
          _
        %s284 = sand.u32 %s21, 1
        %s285 = scalar_lea.sflag [#allocation6], %s284
        %s286 = sand.u32 %s67, 1
        %s287 = smul.addr %s286, 64
        %s288 = scalar_lea.vmem [#allocation5], %s287
        // Predicated region
        $region45: #{tpu_custom_call.1} parent=39 // pred_check
          %p289 = pneg %p80
        $region46: #{tpu_custom_call.1} parent=39 // pred_check_branch
          %291 = sbr.rel (%p289) target = $region48
        $region47: #{tpu_custom_call.1} parent=39 // pred_region
          %292 = dma.done %s285, 1024
        $region48: #{tpu_custom_call.1} parent=39 // pred_fallthru
          _
        %s293 = sand.u32 %s21, 1
        %s294 = scalar_lea.sflag [#allocation6], %s293
        %s295 = sand.u32 %s119, 1
        %s296 = smul.addr %s295, 64
        %s297 = scalar_lea.vmem [#allocation7], %s296
        // Predicated region
        $region49: #{tpu_custom_call.1} parent=39 // pred_check
          %p298 = pneg %p132
        $region50: #{tpu_custom_call.1} parent=39 // pred_check_branch
          %300 = sbr.rel (%p298) target = $region52
        $region51: #{tpu_custom_call.1} parent=39 // pred_region
          %301 = dma.done %s294, 1024
        $region52: #{tpu_custom_call.1} parent=39 // pred_fallthru
          _
        %p302 = pneg %p54
        %p303 = pneg %p51
        %s304 = sand.u32 %s21, 1
        %s305 = scalar_lea.sflag [#allocation6], %s304
        %s306 = sand.u32 %s67, 1
        %s307 = smul.addr %s306, 64
        %s308 = scalar_lea.vmem [#allocation5], %s307
        %p309 = pneg %p80
        %p310 = pneg %p77
        %p311 = scmp.lt.s32.totalorder %s26, 2
        %s312 = scalar_select %p311, %s26, 2
        %s313 = scalar_lea.vmem %s2, %s312
        %p314 = pneg %p106
        %p315 = pneg %p103
        %s316 = sand.u32 %s21, 1
        %s317 = scalar_lea.sflag [#allocation6], %s316
        %s318 = sand.u32 %s119, 1
        %s319 = smul.addr %s318, 64
        %s320 = scalar_lea.vmem [#allocation7], %s319
        %p321 = pneg %p132
        %p322 = pneg %p129
        %p323 = scmp.lt.s32.totalorder %s26, 2
        %s324 = scalar_select %p323, %s26, 2
        %s325 = scalar_lea.vmem %s4, %s324
        %p326 = pneg %p158
        %p327 = pneg %p155
        %p328 = pneg %p184
        %p329 = pneg %p181
        %s330 = smul.u32 2, %s25
        %p331 = scmp.lt.s32.totalorder %s26, 2
        %s332 = scalar_select %p331, %s26, 2
        %s333 = scalar_lea.vmem %s2, %s332
        %p334 = scmp.lt.s32.totalorder %s26, 2
        %s335 = scalar_select %p334, %s26, 2
        %s336 = scalar_lea.vmem %s4, %s335
        %s337 = smul.u32 2, %s25
        %p339 = scmp.eq.s32.totalorder %s26, 0
        // Predicated region
        $region53: #{tpu_custom_call.1} parent=39 // pred_check
          %p340 = pneg %p339
        $region54: #{tpu_custom_call.1} parent=39 // pred_check_branch
          %342 = sbr.rel (%p340) target = $region56
        $region55: #{tpu_custom_call.1} parent=39 // pred_region
          %v343 = vld [vmem:[#allocation2] sm:$0xff]
          %v344 = vld [vmem:[#allocation2 + $0x8] sm:$0xff]
          %345 = vst [vmem:[#allocation8] sm:$0xff] %v343
          %346 = vst [vmem:[#allocation8 + $0x8] sm:$0xff] %v344
        $region56: #{tpu_custom_call.1} parent=39 // pred_fallthru
          _
        %v347 = vld [vmem:[#allocation8] sm:$0xff]
        %v348 = vld [vmem:[#allocation8 + $0x8] sm:$0xff]
        %v349 = vpack.c.bf16 %v348, %v347
        %v350 = vld [vmem:[%s288] sm:$0xf]
        %v351 = vld [vmem:[%s288 + $0x4] sm:$0xf]
        %v352 = vld [vmem:[%s288 + $0x8] sm:$0xf]
        %v353 = vld [vmem:[%s288 + $0xc] sm:$0xf]
        %v354 = vld [vmem:[%s288 + $0x10] sm:$0xf]
        %v355 = vld [vmem:[%s288 + $0x14] sm:$0xf]
        %v356 = vld [vmem:[%s288 + $0x18] sm:$0xf]
        %v357 = vld [vmem:[%s288 + $0x1c] sm:$0xf]
        %v358 = vld [vmem:[%s288 + $0x20] sm:$0xf]
        %v359 = vld [vmem:[%s288 + $0x24] sm:$0xf]
        %v360 = vld [vmem:[%s288 + $0x28] sm:$0xf]
        %v361 = vld [vmem:[%s288 + $0x2c] sm:$0xf]
        %v362 = vld [vmem:[%s288 + $0x30] sm:$0xf]
        %v363 = vld [vmem:[%s288 + $0x34] sm:$0xf]
        %v364 = vld [vmem:[%s288 + $0x38] sm:$0xf]
        %v365 = vld [vmem:[%s288 + $0x3c] sm:$0xf]
        %v366 = vld [vmem:[%s333] sm:$0x1]
        %v368 = vlaneseq
        %v369 = vshrl.u32 %v368, 7
        %v370 = vsub.s32 0, %v369
        %v371 = vrot.slane %v366, %v370
        %v389 = vunpack.c.l.b16 %v350
        %v390 = vunpack.c.l.b16 %v351
        %v391 = vunpack.c.l.b16 %v352
        %v392 = vunpack.c.l.b16 %v353
        %v393 = vunpack.c.l.b16 %v354
        %v394 = vunpack.c.l.b16 %v355
        %v395 = vunpack.c.l.b16 %v356
        %v396 = vunpack.c.l.b16 %v357
        %v397 = vunpack.c.l.b16 %v358
        %v398 = vunpack.c.l.b16 %v359
        %v399 = vunpack.c.l.b16 %v360
        %v400 = vunpack.c.l.b16 %v361
        %v401 = vunpack.c.l.b16 %v362
        %v402 = vunpack.c.l.b16 %v363
        %v403 = vunpack.c.l.b16 %v364
        %v404 = vunpack.c.l.b16 %v365
        %v405 = vpack.c.b16 %v390, %v389
        %v406 = vpack.c.b16 %v392, %v391
        %v407 = vpack.c.b16 %v394, %v393
        %v408 = vpack.c.b16 %v396, %v395
        %v409 = vpack.c.b16 %v398, %v397
        %v410 = vpack.c.b16 %v400, %v399
        %v411 = vpack.c.b16 %v402, %v401
        %v412 = vpack.c.b16 %v404, %v403
        %421 = vmatprep.subr.bf16.mxu0 0
        %422 = vmatpush1.bf16.msra.mxu0 %v405
        %423 = vmatprep.subr.bf16.mxu0 0
        %424 = vmatpush1.bf16.msra.mxu0 %v406
        %425 = vmatprep.subr.bf16.mxu0 0
        %426 = vmatpush1.bf16.msra.mxu0 %v407
        %427 = vmatprep.subr.bf16.mxu0 0
        %428 = vmatpush1.bf16.msra.mxu0 %v408
        %429 = vmatprep.subr.bf16.mxu0 0
        %430 = vmatpush1.bf16.msra.mxu0 %v409
        %431 = vmatprep.subr.bf16.mxu0 0
        %432 = vmatpush1.bf16.msra.mxu0 %v410
        %433 = vmatprep.subr.bf16.mxu0 0
        %434 = vmatpush1.bf16.msra.mxu0 %v411
        %435 = vmatprep.subr.bf16.mxu0 0
        %436 = vmatpush1.bf16.msra.mxu0 %v412
        %437 = vmatprep.subr.bf16.mxu0 0
        %438 = vmatpush1.bf16.msra.mxu0 0
        %439 = vmatprep.subr.bf16.mxu0 0
        %440 = vmatpush1.bf16.msra.mxu0 0
        %441 = vmatprep.subr.bf16.mxu0 0
        %442 = vmatpush1.bf16.msra.mxu0 0
        %443 = vmatprep.subr.bf16.mxu0 0
        %444 = vmatpush1.bf16.msra.mxu0 0
        %445 = vmatprep.subr.bf16.mxu0 0
        %446 = vmatpush1.bf16.msra.mxu0 0
        %447 = vmatprep.subr.bf16.mxu0 0
        %448 = vmatpush1.bf16.msra.mxu0 0
        %449 = vmatprep.subr.bf16.mxu0 0
        %450 = vmatpush1.bf16.msra.mxu0 0
        %451 = vmatprep.subr.bf16.mxu0 0
        %452 = vmatpush1.bf16.msra.mxu0 0
        %453 = vmatprep.mubr.bf16.mxu0 0
        %454 = vmatmul.mubr.bf16.gmra.mrb[0].mxu0 %v349
        %v455 = vpop.f32.mrb[0].mxu0
        %v456 = vadd.f32 %v371, %v455
        %v457 = vpop.f32.mrb[0].mxu0
        %v458 = vpop.f32.mrb[0].mxu0
        %v459 = vadd.f32 %v371, %v458
        %v460 = vpop.f32.mrb[0].mxu0
        %461 = vdwg.mxu0
        %v462 = vmax.f32 %v456, 0.0
        %v463 = vmax.f32 %v459, 0.0
        %v464 = vld [vmem:[%s297] sm:$0xf]
        %v465 = vld [vmem:[%s297 + $0x4] sm:$0xf]
        %v466 = vld [vmem:[%s297 + $0x8] sm:$0xf]
        %v467 = vld [vmem:[%s297 + $0xc] sm:$0xf]
        %v468 = vld [vmem:[%s297 + $0x10] sm:$0xf]
        %v469 = vld [vmem:[%s297 + $0x14] sm:$0xf]
        %v470 = vld [vmem:[%s297 + $0x18] sm:$0xf]
        %v471 = vld [vmem:[%s297 + $0x1c] sm:$0xf]
        %v472 = vld [vmem:[%s297 + $0x20] sm:$0xf]
        %v473 = vld [vmem:[%s297 + $0x24] sm:$0xf]
        %v474 = vld [vmem:[%s297 + $0x28] sm:$0xf]
        %v475 = vld [vmem:[%s297 + $0x2c] sm:$0xf]
        %v476 = vld [vmem:[%s297 + $0x30] sm:$0xf]
        %v477 = vld [vmem:[%s297 + $0x34] sm:$0xf]
        %v478 = vld [vmem:[%s297 + $0x38] sm:$0xf]
        %v479 = vld [vmem:[%s297 + $0x3c] sm:$0xf]
        %v480 = vld [vmem:[%s336] sm:$0x1]
        %v482 = vlaneseq
        %v483 = vshrl.u32 %v482, 7
        %v484 = vsub.s32 0, %v483
        %v485 = vrot.slane %v480, %v484
        %v503 = vunpack.c.l.b16 %v464
        %v504 = vunpack.c.l.b16 %v465
        %v505 = vunpack.c.l.b16 %v466
        %v506 = vunpack.c.l.b16 %v467
        %v507 = vunpack.c.l.b16 %v468
        %v508 = vunpack.c.l.b16 %v469
        %v509 = vunpack.c.l.b16 %v470
        %v510 = vunpack.c.l.b16 %v471
        %v511 = vunpack.c.l.b16 %v472
        %v512 = vunpack.c.l.b16 %v473
        %v513 = vunpack.c.l.b16 %v474
        %v514 = vunpack.c.l.b16 %v475
        %v515 = vunpack.c.l.b16 %v476
        %v516 = vunpack.c.l.b16 %v477
        %v517 = vunpack.c.l.b16 %v478
        %v518 = vunpack.c.l.b16 %v479
        %v519 = vpack.c.b16 %v504, %v503
        %v520 = vpack.c.b16 %v506, %v505
        %v521 = vpack.c.b16 %v508, %v507
        %v522 = vpack.c.b16 %v510, %v509
        %v523 = vpack.c.b16 %v512, %v511
        %v524 = vpack.c.b16 %v514, %v513
        %v525 = vpack.c.b16 %v516, %v515
        %v526 = vpack.c.b16 %v518, %v517
        %535 = vmatprep.subr.bf16.mxu0 0
        %536 = vmatpush1.bf16.msra.mxu0 %v519
        %537 = vmatprep.subr.bf16.mxu0 0
        %538 = vmatpush1.bf16.msra.mxu0 %v520
        %539 = vmatprep.subr.bf16.mxu0 0
        %540 = vmatpush1.bf16.msra.mxu0 %v521
        %541 = vmatprep.subr.bf16.mxu0 0
        %542 = vmatpush1.bf16.msra.mxu0 %v522
        %543 = vmatprep.subr.bf16.mxu0 0
        %544 = vmatpush1.bf16.msra.mxu0 %v523
        %545 = vmatprep.subr.bf16.mxu0 0
        %546 = vmatpush1.bf16.msra.mxu0 %v524
        %547 = vmatprep.subr.bf16.mxu0 0
        %548 = vmatpush1.bf16.msra.mxu0 %v525
        %549 = vmatprep.subr.bf16.mxu0 0
        %550 = vmatpush1.bf16.msra.mxu0 %v526
        %551 = vmatprep.subr.bf16.mxu0 0
        %552 = vmatpush1.bf16.msra.mxu0 0
        %553 = vmatprep.subr.bf16.mxu0 0
        %554 = vmatpush1.bf16.msra.mxu0 0
        %555 = vmatprep.subr.bf16.mxu0 0
        %556 = vmatpush1.bf16.msra.mxu0 0
        %557 = vmatprep.subr.bf16.mxu0 0
        %558 = vmatpush1.bf16.msra.mxu0 0
        %559 = vmatprep.subr.bf16.mxu0 0
        %560 = vmatpush1.bf16.msra.mxu0 0
        %561 = vmatprep.subr.bf16.mxu0 0
        %562 = vmatpush1.bf16.msra.mxu0 0
        %563 = vmatprep.subr.bf16.mxu0 0
        %564 = vmatpush1.bf16.msra.mxu0 0
        %565 = vmatprep.subr.bf16.mxu0 0
        %566 = vmatpush1.bf16.msra.mxu0 0
        %567 = vmatprep.mubr.bf16.mxu0 0
        %568 = vmatmul.mubr.bf16.gmra.mrb[0].mxu0 %v349
        %v569 = vpop.f32.mrb[0].mxu0
        %v570 = vadd.f32 %v485, %v569
        %v571 = vpop.f32.mrb[0].mxu0
        %v572 = vpop.f32.mrb[0].mxu0
        %v573 = vadd.f32 %v485, %v572
        %v574 = vpop.f32.mrb[0].mxu0
        %575 = vdwg.mxu0
        %v576 = vxor.u32 %v570, 2147483648
        %v577 = vxor.u32 %v573, 2147483648
        %v578 = vmul.f32 %v576, 1.442695
        %v579 = vpow.pop %v578
        %v580 = vmul.f32 %v577, 1.442695
        %v581 = vpow.pop %v580
        %v582 = vadd.f32 %v579, 1.0
        %v583 = vadd.f32 %v581, 1.0
        %v584 = vrcp.pop %v582
        %v585 = vmul.f32 1.0, %v584
        %v586 = vrcp.pop %v583
        %v587 = vmul.f32 1.0, %v586
        %v588 = vsub.f32 %v462, %v347
        %v589 = vsub.f32 %v463, %v348
        %v590 = vmul.f32 %v585, %v588
        %v591 = vmul.f32 %v587, %v589
        %v592 = vadd.f32 %v347, %v590
        %v593 = vadd.f32 %v348, %v591
        %594 = vst [vmem:[#allocation8] sm:$0xff] %v592
        %595 = vst [vmem:[#allocation8 + $0x8] sm:$0xff] %v593
        // Predicated region
        $region57: #{tpu_custom_call.1} parent=39 // pred_check
          %p596 = pneg %p181
        $region58: #{tpu_custom_call.1} parent=39 // pred_check_branch
          %598 = sbr.rel (%p596) target = $region60
        $region59: #{tpu_custom_call.1} parent=39 // pred_region
          %s599 = smul.u32 2, %s25
          %s601 = ssub.s32 256, 256
          %602 = vsyncadd [#allocation4], %s601
          %s603 = smul.addr %s599, 128
          %s604 = scalar_lea.hbm %s5, %s603
          %s605 = sshll.u32 [#allocation8], 4
          %s606 = int_to_ptr.vmem [resolvable:$true] %s605
          %611 = dma.vmem_to_hbm [thread:$0]  %s606, 256, %s604, [#allocation4], 128, 128, 8
        $region60: #{tpu_custom_call.1} parent=39 // pred_fallthru
          _
        // Predicated region
        $region61: #{tpu_custom_call.1} parent=39 // pred_check
          %p612 = pneg %p181
        $region62: #{tpu_custom_call.1} parent=39 // pred_check_branch
          %614 = sbr.rel (%p612) target = $region64
        $region63: #{tpu_custom_call.1} parent=39 // pred_region
          %615 = dma.done [#allocation4], 256
        $region64: #{tpu_custom_call.1} parent=39 // pred_fallthru
          _
      $region40: #{tpu_custom_call.1} parent=5 // pred_fallthru
        _
      %p616 = scmp.le.s32.totalorder 2, %s16
      // Predicated region
      $region65: #{tpu_custom_call.1} parent=5 // pred_check
        %p617 = pneg %p616
      $region66: #{tpu_custom_call.1} parent=5 // pred_check_branch
        %619 = sbr.rel (%p617) target = $region68
      $region67: #{tpu_custom_call.1} parent=5 // pred_region
        %s620 = ssub.s32 %s16, 2
      $region68: #{tpu_custom_call.1} parent=5 // pred_fallthru
        _
    $region6: #{tpu_custom_call.1} parent=1 // loop_footer
      %s20 = sadd.s32 1, %s16
    $region7: #{tpu_custom_call.1} parent=1 // loop_footer_branch
      %15 = sbr.rel target = $region3
    $region8: #{tpu_custom_call.1} parent=1 // loop_exit
      _
    %621 = vsyncpa [#allocation3], 1
    %s622 = scalar_lea.sflag [#allocation3], 1
    %623 = vsyncpa %s622, 1
    %624 = vsyncpa [#allocation6], 1
    %s625 = scalar_lea.sflag [#allocation6], 1
    %626 = vsyncpa %s625, 1
    %627 = vsyncpa [#allocation4], 1
    %s628 = scalar_lea.sflag [#allocation4], 1
    %629 = vsyncpa %s628, 1

</llo_original>
